<compile_context>
chip_gen: v6e
topology: v6e:2x2x1
jax: 0.10.0
libtpu: 0.0.40
codegen_flags: <defaults>
</compile_context>

<pallas_src>
import functools

import jax
import jax.numpy as jnp
from jax.experimental import pallas as pl
from jax.experimental.pallas import tpu as pltpu

# ---------------- "args" hyper-parameters ----------------
INPUT_DIM = 768          # BERT hidden size
HIDDEN = 32              # args.hidden
EMBED_SIZE = 16          # args.embed_size
BATCH = 2                # batch per encoded input

STRENGTH_ALPHA = 0.1     # args.strength_alpha
GAMMA_COEFF = 1.0        # args.gamma_coeff
MARGIN = 1.0             # args.margin
EULER_GAMMA = 0.5772156649015329
GUMBEL_BETA = 0.01
EPS_TINY = float(jnp.finfo(jnp.float32).tiny)


# ---------------- in-kernel numeric helpers (pure elementwise) ----------------
def _softplus(x):
    # stable softplus (beta=1, matches F.softplus up to fp rounding)
    # TODO(synk): jnp.log1p would be bit-closer to F.softplus near 0; kept
    #             log(1 + x) for guaranteed Mosaic lowering.
    return jnp.maximum(x, 0.0) + jnp.log(1.0 + jnp.exp(-jnp.abs(x)))


def _logaddexp(a, b):
    # single-transcendental form: max(a,b) + log(1 + exp(-|a-b|))
    return jnp.maximum(a, b) + _softplus(-jnp.abs(a - b))


# ---------------- the single fused kernel ------------------------------------
def _fused_kernel(x_ref, w1_ref, w2_ref, b_ref, out_ref):
    gb = GUMBEL_BETA
    nb = x_ref.shape[0] // 4            # B; rows = [parent(B); neg(B); child(B); child(B)]

    x = x_ref[...]                      # [4B, 768] bf16
    w1 = w1_ref[...]                    # [768, 2H] bf16  (W1_min || W1_max)
    w2 = w2_ref[...]                    # [2H, 2E]  bf16  block-diag(W2_min, W2_max)
    b = b_ref[...]                      # [1, 2H+2E] f32  (b1_min||b1_max||b2_min||b2_max)
    b1 = b[:, : 2 * HIDDEN]
    b2 = b[:, 2 * HIDDEN:]

    # ---- fused two-layer MLP for all four stacked boxes: one MXU pass/layer ----
    h = jnp.dot(x, w1, preferred_element_type=jnp.float32) + b1          # [4B, 2H]
    h = jnp.maximum(h, 0.0)                                              # ReLU
    mm = jnp.dot(h.astype(jnp.bfloat16), w2,
                 preferred_element_type=jnp.float32) + b2                # [4B, 2E]
    min_all = mm[:, :EMBED_SIZE]                                         # [4B, E]
    max_all = mm[:, EMBED_SIZE:]                                         # [4B, E]

    other_min, other_max = min_all[: 2 * nb], max_all[: 2 * nb]   # [parent; neg]  [2B, E]
    child_min, child_max = min_all[2 * nb:], max_all[2 * nb:]     # [child; child] [2B, E]

    # ---- gumbel-box intersections (child∩parent and child∩neg) in one pass ----
    imin = gb * _logaddexp(child_min / gb, other_min / gb)
    imin = jnp.maximum(imin, jnp.maximum(child_min, other_min))
    imax = -gb * _logaddexp(-child_max / gb, -other_max / gb)
    imax = jnp.minimum(imax, jnp.minimum(child_max, other_max))

    def log_volume(delta):
        sp = _softplus(delta - 2.0 * EULER_GAMMA * gb)
        sp = jnp.maximum(sp, EPS_TINY)                     # .clamp_min(eps)
        # + log(scale) with scale = 1.0 -> + 0
        return jnp.sum(jnp.log(sp), axis=-1, keepdims=True)

    ivol = log_volume(imax - imin)                                   # [2B,1]: pos rows then neg rows
    child_vol = log_volume(child_max[:nb] - child_min[:nb])          # [B, 1]
    pos_vol, neg_vol = ivol[:nb], ivol[nb:]                          # [B, 1] each

    # possibility loss: mean over batch of -logsigmoid(gamma*(pos - margin - neg))
    diff = _softplus(-(GAMMA_COEFF * (pos_vol - MARGIN - neg_vol)))  # = -logsigmoid(.)
    possibility_loss = jnp.mean(diff, axis=(0, 1), keepdims=True)    # [1, 1]

    # asymmetry losses
    asym_loss = (jnp.mean(jnp.square(pos_vol / child_vol - 1.0), axis=(0, 1), keepdims=True)
                 + jnp.mean(jnp.square(neg_vol / child_vol), axis=(0, 1), keepdims=True))

    total_loss = possibility_loss + STRENGTH_ALPHA * asym_loss       # [1, 1]

    # lane-dense (1, 128) output: lanes 0/1/2 = total / possibility / asym
    lane = jax.lax.broadcasted_iota(jnp.int32, (1, out_ref.shape[1]), 1)
    out_ref[...] = jnp.where(lane == 0, total_loss,
                             jnp.where(lane == 1, possibility_loss,
                                       jnp.where(lane == 2, asym_loss, 0.0)))


# ---------------- parameters (mirror two PyTorch MLPs) & packing --------------
def init_params(key):
    def linear(k, din, dout):
        k1, k2 = jax.random.split(k)
        scale = 1.0 / jnp.sqrt(jnp.float32(din))
        w = jax.random.uniform(k1, (din, dout), jnp.float32, -scale, scale)
        b = jax.random.uniform(k2, (1, dout), jnp.float32, -scale, scale)
        return w, b

    keys = jax.random.split(key, 4)
    w1_min, b1_min = linear(keys[0], INPUT_DIM, HIDDEN)
    w2_min, b2_min = linear(keys[1], HIDDEN, EMBED_SIZE)
    w1_max, b1_max = linear(keys[2], INPUT_DIM, HIDDEN)
    w2_max, b2_max = linear(keys[3], HIDDEN, EMBED_SIZE)
    return {
        "proj_min": (w1_min, b1_min, w2_min, b2_min),
        "proj_max": (w1_max, b1_max, w2_max, b2_max),
    }


def pack_params(params):
    """One-time host-side packing: fused bf16 first layer, bf16 block-diag second
    layer, and a single packed f32 bias row."""
    w1_min, b1_min, w2_min, b2_min = params["proj_min"]
    w1_max, b1_max, w2_max, b2_max = params["proj_max"]
    w1 = jnp.concatenate([w1_min, w1_max], axis=1).astype(jnp.bfloat16)   # [768, 2H]
    top = jnp.concatenate([w2_min, jnp.zeros_like(w2_min)], axis=1)       # [H, 2E]
    bot = jnp.concatenate([jnp.zeros_like(w2_max), w2_max], axis=1)       # [H, 2E]
    w2 = jnp.concatenate([top, bot], axis=0).astype(jnp.bfloat16)         # [2H, 2E]
    b = jnp.concatenate([b1_min, b1_max, b2_min, b2_max], axis=1)         # [1, 2H+2E] f32
    return w1, w2, b


# ---------------- forward wrapper ---------------------------------------------
def fuzzy_box_forward(packed_params, cls_parent, cls_child, cls_neg_parent):
    """FuzzyBoxEmb.forward: returns (total_loss, possibility_loss, asym_poss_loss)."""
    w1, w2, b = packed_params

    # Stack [parent; neg; child; child] (bf16) so the kernel runs ONE fused
    # projection and the two intersections pair up row-wise with no concat.
    x = jnp.concatenate(
        [cls_parent, cls_neg_parent, cls_child, cls_child], axis=0
    ).astype(jnp.bfloat16)                                                # [4B, 768]

    vmem = pltpu.MemorySpace.VMEM
    out = pl.pallas_call(
        _fused_kernel,
        out_shape=jax.ShapeDtypeStruct((1, 128), jnp.float32),
        in_specs=[pl.BlockSpec(memory_space=vmem) for _ in range(4)],
        out_specs=pl.BlockSpec(memory_space=vmem),
    )(x, w1, w2, b)

    return out[0, 0], out[0, 1], out[0, 2]


if __name__ == "__main__":
    key = jax.random.PRNGKey(0)
    kp, kc, kn, kw = jax.random.split(key, 4)
    cls_parent = jax.random.normal(kp, (BATCH, INPUT_DIM), jnp.float32)
    cls_child = jax.random.normal(kc, (BATCH, INPUT_DIM), jnp.float32)
    cls_neg = jax.random.normal(kn, (BATCH, INPUT_DIM), jnp.float32)

    params = init_params(kw)
    packed = pack_params(params)

    fwd = jax.jit(functools.partial(fuzzy_box_forward, packed))
    total_loss, possibility_loss, asym_loss = fwd(cls_parent, cls_child, cls_neg)
    jax.block_until_ready((total_loss, possibility_loss, asym_loss))
    print("KERNEL_OK")
</pallas_src>

<mosaic_0001>
module attributes {stable_mosaic.version = 11 : i64} {
  func.func @_fused_kernel(%arg0: memref<8x768xbf16, #tpu.memory_space<vmem>>, %arg1: memref<768x64xbf16, #tpu.memory_space<vmem>>, %arg2: memref<64x32xbf16, #tpu.memory_space<vmem>>, %arg3: memref<1x96xf32, #tpu.memory_space<vmem>>, %arg4: memref<1x128xf32, #tpu.memory_space<vmem>>) attributes {dimension_semantics = [], scalar_prefetch = 0 : i64, scratch_operands = 0 : i64, tpu.core_type = #tpu.core_type<tc>} {
    %c0 = arith.constant 0 : index
    %c0_0 = arith.constant 0 : index
    %0 = vector.load %arg0[%c0, %c0_0] : memref<8x768xbf16, #tpu.memory_space<vmem>>, vector<8x768xbf16>
    %c0_1 = arith.constant 0 : index
    %c0_2 = arith.constant 0 : index
    %1 = vector.load %arg1[%c0_1, %c0_2] : memref<768x64xbf16, #tpu.memory_space<vmem>>, vector<768x64xbf16>
    %c0_3 = arith.constant 0 : index
    %c0_4 = arith.constant 0 : index
    %2 = vector.load %arg2[%c0_3, %c0_4] : memref<64x32xbf16, #tpu.memory_space<vmem>>, vector<64x32xbf16>
    %c0_5 = arith.constant 0 : index
    %c0_6 = arith.constant 0 : index
    %3 = vector.load %arg3[%c0_5, %c0_6] : memref<1x96xf32, #tpu.memory_space<vmem>>, vector<1x96xf32>
    %4 = vector.extract_strided_slice %3 {offsets = [0, 0], sizes = [1, 64], strides = [1, 1]} : vector<1x96xf32> to vector<1x64xf32>
    %5 = vector.extract_strided_slice %3 {offsets = [0, 64], sizes = [1, 32], strides = [1, 1]} : vector<1x96xf32> to vector<1x32xf32>
    %cst = arith.constant dense<0.000000e+00> : vector<8x64xf32>
    %6 = tpu.matmul %0, %1, %cst {dimension_numbers = #tpu.dot_dimension_numbers<[1], [0], [0], [1], [0, 0, 1, 1], [], []>} : vector<8x768xbf16>, vector<768x64xbf16>, vector<8x64xf32> -> vector<8x64xf32>
    %7 = vector.broadcast %4 : vector<1x64xf32> to vector<8x64xf32>
    %8 = arith.addf %6, %7 : vector<8x64xf32>
    %cst_7 = arith.constant 0.000000e+00 : f32
    %9 = vector.broadcast %cst_7 : f32 to vector<8x64xf32>
    %10 = arith.maximumf %8, %9 : vector<8x64xf32>
    %11 = arith.truncf %10 : vector<8x64xf32> to vector<8x64xbf16>
    %cst_8 = arith.constant dense<0.000000e+00> : vector<8x32xf32>
    %12 = tpu.matmul %11, %2, %cst_8 {dimension_numbers = #tpu.dot_dimension_numbers<[1], [0], [0], [1], [0, 0, 1, 1], [], []>} : vector<8x64xbf16>, vector<64x32xbf16>, vector<8x32xf32> -> vector<8x32xf32>
    %13 = vector.broadcast %5 : vector<1x32xf32> to vector<8x32xf32>
    %14 = arith.addf %12, %13 : vector<8x32xf32>
    %15 = vector.extract_strided_slice %14 {offsets = [0, 0], sizes = [8, 16], strides = [1, 1]} : vector<8x32xf32> to vector<8x16xf32>
    %16 = vector.extract_strided_slice %14 {offsets = [0, 16], sizes = [8, 16], strides = [1, 1]} : vector<8x32xf32> to vector<8x16xf32>
    %17 = vector.extract_strided_slice %15 {offsets = [0, 0], sizes = [4, 16], strides = [1, 1]} : vector<8x16xf32> to vector<4x16xf32>
    %18 = vector.extract_strided_slice %16 {offsets = [0, 0], sizes = [4, 16], strides = [1, 1]} : vector<8x16xf32> to vector<4x16xf32>
    %19 = vector.extract_strided_slice %15 {offsets = [4, 0], sizes = [4, 16], strides = [1, 1]} : vector<8x16xf32> to vector<4x16xf32>
    %20 = vector.extract_strided_slice %16 {offsets = [4, 0], sizes = [4, 16], strides = [1, 1]} : vector<8x16xf32> to vector<4x16xf32>
    %cst_9 = arith.constant 0.00999999977 : f32
    %21 = vector.broadcast %cst_9 : f32 to vector<4x16xf32>
    %22 = arith.divf %19, %21 : vector<4x16xf32>
    %cst_10 = arith.constant 0.00999999977 : f32
    %23 = vector.broadcast %cst_10 : f32 to vector<4x16xf32>
    %24 = arith.divf %17, %23 : vector<4x16xf32>
    %25 = arith.maximumf %22, %24 : vector<4x16xf32>
    %26 = arith.subf %22, %24 : vector<4x16xf32>
    %27 = math.absf %26 : vector<4x16xf32>
    %cst_11 = arith.constant 0.000000e+00 : f32
    %28 = vector.broadcast %cst_11 : f32 to vector<4x16xf32>
    %29 = arith.subf %28, %27 : vector<4x16xf32>
    %cst_12 = arith.constant 0.000000e+00 : f32
    %30 = vector.broadcast %cst_12 : f32 to vector<4x16xf32>
    %31 = arith.maximumf %29, %30 : vector<4x16xf32>
    %32 = math.absf %29 : vector<4x16xf32>
    %cst_13 = arith.constant 0.000000e+00 : f32
    %33 = vector.broadcast %cst_13 : f32 to vector<4x16xf32>
    %34 = arith.subf %33, %32 : vector<4x16xf32>
    %35 = math.exp %34 : vector<4x16xf32>
    %cst_14 = arith.constant 1.000000e+00 : f32
    %36 = vector.broadcast %cst_14 : f32 to vector<4x16xf32>
    %37 = arith.addf %36, %35 : vector<4x16xf32>
    %38 = math.log %37 : vector<4x16xf32>
    %39 = arith.addf %31, %38 : vector<4x16xf32>
    %40 = arith.addf %25, %39 : vector<4x16xf32>
    %cst_15 = arith.constant 0.00999999977 : f32
    %41 = vector.broadcast %cst_15 : f32 to vector<4x16xf32>
    %42 = arith.mulf %41, %40 : vector<4x16xf32>
    %43 = arith.maximumf %19, %17 : vector<4x16xf32>
    %44 = arith.maximumf %42, %43 : vector<4x16xf32>
    %cst_16 = arith.constant 0.000000e+00 : f32
    %45 = vector.broadcast %cst_16 : f32 to vector<4x16xf32>
    %46 = arith.subf %45, %20 : vector<4x16xf32>
    %cst_17 = arith.constant 0.00999999977 : f32
    %47 = vector.broadcast %cst_17 : f32 to vector<4x16xf32>
    %48 = arith.divf %46, %47 : vector<4x16xf32>
    %cst_18 = arith.constant 0.000000e+00 : f32
    %49 = vector.broadcast %cst_18 : f32 to vector<4x16xf32>
    %50 = arith.subf %49, %18 : vector<4x16xf32>
    %cst_19 = arith.constant 0.00999999977 : f32
    %51 = vector.broadcast %cst_19 : f32 to vector<4x16xf32>
    %52 = arith.divf %50, %51 : vector<4x16xf32>
    %53 = arith.maximumf %48, %52 : vector<4x16xf32>
    %54 = arith.subf %48, %52 : vector<4x16xf32>
    %55 = math.absf %54 : vector<4x16xf32>
    %cst_20 = arith.constant 0.000000e+00 : f32
    %56 = vector.broadcast %cst_20 : f32 to vector<4x16xf32>
    %57 = arith.subf %56, %55 : vector<4x16xf32>
    %cst_21 = arith.constant 0.000000e+00 : f32
    %58 = vector.broadcast %cst_21 : f32 to vector<4x16xf32>
    %59 = arith.maximumf %57, %58 : vector<4x16xf32>
    %60 = math.absf %57 : vector<4x16xf32>
    %cst_22 = arith.constant 0.000000e+00 : f32
    %61 = vector.broadcast %cst_22 : f32 to vector<4x16xf32>
    %62 = arith.subf %61, %60 : vector<4x16xf32>
    %63 = math.exp %62 : vector<4x16xf32>
    %cst_23 = arith.constant 1.000000e+00 : f32
    %64 = vector.broadcast %cst_23 : f32 to vector<4x16xf32>
    %65 = arith.addf %64, %63 : vector<4x16xf32>
    %66 = math.log %65 : vector<4x16xf32>
    %67 = arith.addf %59, %66 : vector<4x16xf32>
    %68 = arith.addf %53, %67 : vector<4x16xf32>
    %cst_24 = arith.constant -0.00999999977 : f32
    %69 = vector.broadcast %cst_24 : f32 to vector<4x16xf32>
    %70 = arith.mulf %69, %68 : vector<4x16xf32>
    %71 = arith.minimumf %20, %18 : vector<4x16xf32>
    %72 = arith.minimumf %70, %71 : vector<4x16xf32>
    %73 = arith.subf %72, %44 : vector<4x16xf32>
    %cst_25 = arith.constant 0.0115443133 : f32
    %74 = vector.broadcast %cst_25 : f32 to vector<4x16xf32>
    %75 = arith.subf %73, %74 : vector<4x16xf32>
    %cst_26 = arith.constant 0.000000e+00 : f32
    %76 = vector.broadcast %cst_26 : f32 to vector<4x16xf32>
    %77 = arith.maximumf %75, %76 : vector<4x16xf32>
    %78 = math.absf %75 : vector<4x16xf32>
    %cst_27 = arith.constant 0.000000e+00 : f32
    %79 = vector.broadcast %cst_27 : f32 to vector<4x16xf32>
    %80 = arith.subf %79, %78 : vector<4x16xf32>
    %81 = math.exp %80 : vector<4x16xf32>
    %cst_28 = arith.constant 1.000000e+00 : f32
    %82 = vector.broadcast %cst_28 : f32 to vector<4x16xf32>
    %83 = arith.addf %82, %81 : vector<4x16xf32>
    %84 = math.log %83 : vector<4x16xf32>
    %85 = arith.addf %77, %84 : vector<4x16xf32>
    %cst_29 = arith.constant 1.17549435E-38 : f32
    %86 = vector.broadcast %cst_29 : f32 to vector<4x16xf32>
    %87 = arith.maximumf %85, %86 : vector<4x16xf32>
    %88 = math.log %87 : vector<4x16xf32>
    %cst_30 = arith.constant dense<0.000000e+00> : vector<4xf32>
    %89 = vector.multi_reduction <add>, %88, %cst_30 [1] : vector<4x16xf32> to vector<4xf32>
    %90 = vector.shape_cast %89 : vector<4xf32> to vector<4x1xf32>
    %91 = vector.extract_strided_slice %20 {offsets = [0, 0], sizes = [2, 16], strides = [1, 1]} : vector<4x16xf32> to vector<2x16xf32>
    %92 = vector.extract_strided_slice %19 {offsets = [0, 0], sizes = [2, 16], strides = [1, 1]} : vector<4x16xf32> to vector<2x16xf32>
    %93 = arith.subf %91, %92 : vector<2x16xf32>
    %cst_31 = arith.constant 0.0115443133 : f32
    %94 = vector.broadcast %cst_31 : f32 to vector<2x16xf32>
    %95 = arith.subf %93, %94 : vector<2x16xf32>
    %cst_32 = arith.constant 0.000000e+00 : f32
    %96 = vector.broadcast %cst_32 : f32 to vector<2x16xf32>
    %97 = arith.maximumf %95, %96 : vector<2x16xf32>
    %98 = math.absf %95 : vector<2x16xf32>
    %cst_33 = arith.constant 0.000000e+00 : f32
    %99 = vector.broadcast %cst_33 : f32 to vector<2x16xf32>
    %100 = arith.subf %99, %98 : vector<2x16xf32>
    %101 = math.exp %100 : vector<2x16xf32>
    %cst_34 = arith.constant 1.000000e+00 : f32
    %102 = vector.broadcast %cst_34 : f32 to vector<2x16xf32>
    %103 = arith.addf %102, %101 : vector<2x16xf32>
    %104 = math.log %103 : vector<2x16xf32>
    %105 = arith.addf %97, %104 : vector<2x16xf32>
    %cst_35 = arith.constant 1.17549435E-38 : f32
    %106 = vector.broadcast %cst_35 : f32 to vector<2x16xf32>
    %107 = arith.maximumf %105, %106 : vector<2x16xf32>
    %108 = math.log %107 : vector<2x16xf32>
    %cst_36 = arith.constant dense<0.000000e+00> : vector<2xf32>
    %109 = vector.multi_reduction <add>, %108, %cst_36 [1] : vector<2x16xf32> to vector<2xf32>
    %110 = vector.shape_cast %109 : vector<2xf32> to vector<2x1xf32>
    %111 = vector.extract_strided_slice %90 {offsets = [0, 0], sizes = [2, 1], strides = [1, 1]} : vector<4x1xf32> to vector<2x1xf32>
    %112 = vector.extract_strided_slice %90 {offsets = [2, 0], sizes = [2, 1], strides = [1, 1]} : vector<4x1xf32> to vector<2x1xf32>
    %cst_37 = arith.constant 1.000000e+00 : f32
    %113 = vector.broadcast %cst_37 : f32 to vector<2x1xf32>
    %114 = arith.subf %111, %113 : vector<2x1xf32>
    %115 = arith.subf %114, %112 : vector<2x1xf32>
    %cst_38 = arith.constant 1.000000e+00 : f32
    %116 = vector.broadcast %cst_38 : f32 to vector<2x1xf32>
    %117 = arith.mulf %116, %115 : vector<2x1xf32>
    %cst_39 = arith.constant 0.000000e+00 : f32
    %118 = vector.broadcast %cst_39 : f32 to vector<2x1xf32>
    %119 = arith.subf %118, %117 : vector<2x1xf32>
    %cst_40 = arith.constant 0.000000e+00 : f32
    %120 = vector.broadcast %cst_40 : f32 to vector<2x1xf32>
    %121 = arith.maximumf %119, %120 : vector<2x1xf32>
    %122 = math.absf %119 : vector<2x1xf32>
    %cst_41 = arith.constant 0.000000e+00 : f32
    %123 = vector.broadcast %cst_41 : f32 to vector<2x1xf32>
    %124 = arith.subf %123, %122 : vector<2x1xf32>
    %125 = math.exp %124 : vector<2x1xf32>
    %cst_42 = arith.constant 1.000000e+00 : f32
    %126 = vector.broadcast %cst_42 : f32 to vector<2x1xf32>
    %127 = arith.addf %126, %125 : vector<2x1xf32>
    %128 = math.log %127 : vector<2x1xf32>
    %129 = arith.addf %121, %128 : vector<2x1xf32>
    %130 = vector.shape_cast %129 : vector<2x1xf32> to vector<1x2x1xf32>
    %cst_43 = arith.constant dense<0.000000e+00> : vector<1xf32>
    %131 = vector.multi_reduction <add>, %130, %cst_43 [1, 2] : vector<1x2x1xf32> to vector<1xf32>
    %132 = vector.shape_cast %131 : vector<1xf32> to vector<1x1x1xf32>
    %133 = vector.extract %132[0, 0, 0] : f32 from vector<1x1x1xf32>
    %134 = vector.broadcast %133 : f32 to vector<1x1xf32>
    %cst_44 = arith.constant 2.000000e+00 : f32
    %135 = vector.broadcast %cst_44 : f32 to vector<1x1xf32>
    %136 = arith.divf %134, %135 : vector<1x1xf32>
    %137 = arith.divf %111, %110 : vector<2x1xf32>
    %cst_45 = arith.constant 1.000000e+00 : f32
    %138 = vector.broadcast %cst_45 : f32 to vector<2x1xf32>
    %139 = arith.subf %137, %138 : vector<2x1xf32>
    %140 = arith.mulf %139, %139 : vector<2x1xf32>
    %141 = vector.shape_cast %140 : vector<2x1xf32> to vector<1x2x1xf32>
    %cst_46 = arith.constant dense<0.000000e+00> : vector<1xf32>
    %142 = vector.multi_reduction <add>, %141, %cst_46 [1, 2] : vector<1x2x1xf32> to vector<1xf32>
    %143 = vector.shape_cast %142 : vector<1xf32> to vector<1x1x1xf32>
    %144 = vector.extract %143[0, 0, 0] : f32 from vector<1x1x1xf32>
    %145 = vector.broadcast %144 : f32 to vector<1x1xf32>
    %cst_47 = arith.constant 2.000000e+00 : f32
    %146 = vector.broadcast %cst_47 : f32 to vector<1x1xf32>
    %147 = arith.divf %145, %146 : vector<1x1xf32>
    %148 = arith.divf %112, %110 : vector<2x1xf32>
    %149 = arith.mulf %148, %148 : vector<2x1xf32>
    %150 = vector.shape_cast %149 : vector<2x1xf32> to vector<1x2x1xf32>
    %cst_48 = arith.constant dense<0.000000e+00> : vector<1xf32>
    %151 = vector.multi_reduction <add>, %150, %cst_48 [1, 2] : vector<1x2x1xf32> to vector<1xf32>
    %152 = vector.shape_cast %151 : vector<1xf32> to vector<1x1x1xf32>
    %153 = vector.extract %152[0, 0, 0] : f32 from vector<1x1x1xf32>
    %154 = vector.broadcast %153 : f32 to vector<1x1xf32>
    %cst_49 = arith.constant 2.000000e+00 : f32
    %155 = vector.broadcast %cst_49 : f32 to vector<1x1xf32>
    %156 = arith.divf %154, %155 : vector<1x1xf32>
    %157 = arith.addf %147, %156 : vector<1x1xf32>
    %cst_50 = arith.constant 1.000000e-01 : f32
    %158 = vector.broadcast %cst_50 : f32 to vector<1x1xf32>
    %159 = arith.mulf %158, %157 : vector<1x1xf32>
    %160 = arith.addf %136, %159 : vector<1x1xf32>
    %161 = tpu.iota {dimensions = array<i32: 1>} : vector<1x128xi32>
    %c0_i32 = arith.constant 0 : i32
    %162 = vector.broadcast %c0_i32 : i32 to vector<1x128xi32>
    %163 = arith.cmpi eq, %161, %162 : vector<1x128xi32>
    %c1_i32 = arith.constant 1 : i32
    %164 = vector.broadcast %c1_i32 : i32 to vector<1x128xi32>
    %165 = arith.cmpi eq, %161, %164 : vector<1x128xi32>
    %c2_i32 = arith.constant 2 : i32
    %166 = vector.broadcast %c2_i32 : i32 to vector<1x128xi32>
    %167 = arith.cmpi eq, %161, %166 : vector<1x128xi32>
    %cst_51 = arith.constant 0.000000e+00 : f32
    %168 = vector.shape_cast %157 : vector<1x1xf32> to vector<1x1xf32>
    %169 = vector.broadcast %168 : vector<1x1xf32> to vector<1x128xf32>
    %170 = vector.broadcast %cst_51 : f32 to vector<1x128xf32>
    %171 = arith.select %167, %169, %170 : vector<1x128xi1>, vector<1x128xf32>
    %172 = vector.shape_cast %136 : vector<1x1xf32> to vector<1x1xf32>
    %173 = vector.broadcast %172 : vector<1x1xf32> to vector<1x128xf32>
    %174 = arith.select %165, %173, %171 : vector<1x128xi1>, vector<1x128xf32>
    %175 = vector.shape_cast %160 : vector<1x1xf32> to vector<1x1xf32>
    %176 = vector.broadcast %175 : vector<1x1xf32> to vector<1x128xf32>
    %177 = arith.select %163, %176, %174 : vector<1x128xi1>, vector<1x128xf32>
    %c0_52 = arith.constant 0 : index
    %c0_53 = arith.constant 0 : index
    %178 = vector.load %arg4[%c0_52, %c0_53] : memref<1x128xf32, #tpu.memory_space<vmem>>, vector<1x128xf32>
    tpu.vector_store %arg4[%c0_52, %c0_53], %177 {strides = array<i32>} : memref<1x128xf32, #tpu.memory_space<vmem>>, vector<1x128xf32>,
    return
  }
}

</mosaic_0001>

<llo_original>
// kernel: fuzzy_box_forward.1
$region0: #{fuzzy_box_forward.1}
  #allocation0 [shape = 'u32[]', space=smem, size = 0x4, offset = 0x4, fixed_abs, tag = 'smem constant byte address 0x4 - core index']
  #allocation1 [shape = 'u32[144,128]{1,0:T(1,128)}', space=vmem, size = 0x12000, scoped, tag = 'internal scratch']
  %s0 = inlined_call_operand.vmem [shape: bf16[8,768], index: 0, kind: input, shape index: {}]
  %s1 = inlined_call_operand.hbm [shape: bf16[768,64], index: 1, kind: input, shape index: {}]
  %s2 = inlined_call_operand.vmem [shape: bf16[64,32], index: 2, kind: input, shape index: {}]
  %s3 = inlined_call_operand.vmem [shape: f32[1,96], index: 3, kind: input, shape index: {}]
  %s4 = inlined_call_operand.vmem [shape: f32[1,128], index: 4, kind: output, shape index: {}]
  %s5 = sld [smem:[#allocation0]]
  $region30: #{fuzzy_box_forward.1} parent=0
    _
  %s7 = ssub.s32 1, %s5
  %s8 = scalar_select 0, %s7, %s5
  $region1: #{fuzzy_box_forward.1} parent=0
    #allocation2 [shape = 'u8[196608]{0}', space=vmem, size = 0x30000, scoped, tag = 'input window, operand 1, single buffered']
    #allocation3 [shape = 's32[1]{0}', space=sflag, size = 0x4, scoped, tag = 'scoped memory for fuzzy_box_forward.1']
    %9 = vsyncpa [#allocation3], 0
    // Predicated region
    $region2: #{fuzzy_box_forward.1} parent=1 // pred_check
      _
    $region3: #{fuzzy_box_forward.1} parent=1 // pred_check_branch
      %11 = sbr.rel (0) target = $region5
    $region4: #{fuzzy_box_forward.1} parent=1 // pred_region
      _
    $region5: #{fuzzy_box_forward.1} parent=1 // pred_fallthru
      _
    // Predicated region
    $region6: #{fuzzy_box_forward.1} parent=1 // pred_check
      _
    $region7: #{fuzzy_box_forward.1} parent=1 // pred_check_branch
      %13 = sbr.rel (0) target = $region9
    $region8: #{fuzzy_box_forward.1} parent=1 // pred_region
      %s15 = ssub.s32 6144, 6144
      %16 = vsyncadd [#allocation3], %s15
      %s17 = sshll.u32 [#allocation2], 4
      %s18 = int_to_ptr.vmem [resolvable:$true] %s17
      %23 = dma.hbm_to_vmem [thread:$0]  %s1, 6144, %s18, [#allocation3], 64, 64, 4
    $region9: #{fuzzy_box_forward.1} parent=1 // pred_fallthru
      _
    // Predicated region
    $region10: #{fuzzy_box_forward.1} parent=1 // pred_check
      _
    $region11: #{fuzzy_box_forward.1} parent=1 // pred_check_branch
      %25 = sbr.rel (0) target = $region13
    $region12: #{fuzzy_box_forward.1} parent=1 // pred_region
      _
    $region13: #{fuzzy_box_forward.1} parent=1 // pred_fallthru
      _
    // Predicated region
    $region14: #{fuzzy_box_forward.1} parent=1 // pred_check
      _
    $region15: #{fuzzy_box_forward.1} parent=1 // pred_check_branch
      %27 = sbr.rel (0) target = $region17
    $region16: #{fuzzy_box_forward.1} parent=1 // pred_region
      _
    $region17: #{fuzzy_box_forward.1} parent=1 // pred_fallthru
      _
    // Predicated region
    $region18: #{fuzzy_box_forward.1} parent=1 // pred_check
      _
    $region19: #{fuzzy_box_forward.1} parent=1 // pred_check_branch
      %29 = sbr.rel (0) target = $region21
    $region20: #{fuzzy_box_forward.1} parent=1 // pred_region
      %30 = dma.done [#allocation3], 6144
    $region21: #{fuzzy_box_forward.1} parent=1 // pred_fallthru
      _
    %v32 = vld [vmem:[%s0] sm:$0xff]
    %v33 = vld [vmem:[%s0 + $0x8] sm:$0xff]
    %v34 = vld [vmem:[%s0 + $0x10] sm:$0xff]
    %v35 = vld [vmem:[#allocation2] sm:$0xf]
    %v36 = vld [vmem:[#allocation2 + $0x4] sm:$0xf]
    %v37 = vld [vmem:[#allocation2 + $0x8] sm:$0xf]
    %v38 = vld [vmem:[#allocation2 + $0xc] sm:$0xf]
    %v39 = vld [vmem:[#allocation2 + $0x10] sm:$0xf]
    %v40 = vld [vmem:[#allocation2 + $0x14] sm:$0xf]
    %v41 = vld [vmem:[#allocation2 + $0x18] sm:$0xf]
    %v42 = vld [vmem:[#allocation2 + $0x1c] sm:$0xf]
    %v43 = vld [vmem:[#allocation2 + $0x20] sm:$0xf]
    %v44 = vld [vmem:[#allocation2 + $0x24] sm:$0xf]
    %v45 = vld [vmem:[#allocation2 + $0x28] sm:$0xf]
    %v46 = vld [vmem:[#allocation2 + $0x2c] sm:$0xf]
    %v47 = vld [vmem:[#allocation2 + $0x30] sm:$0xf]
    %v48 = vld [vmem:[#allocation2 + $0x34] sm:$0xf]
    %v49 = vld [vmem:[#allocation2 + $0x38] sm:$0xf]
    %v50 = vld [vmem:[#allocation2 + $0x3c] sm:$0xf]
    %v51 = vld [vmem:[#allocation2 + $0x40] sm:$0xf]
    %v52 = vld [vmem:[#allocation2 + $0x44] sm:$0xf]
    %v53 = vld [vmem:[#allocation2 + $0x48] sm:$0xf]
    %v54 = vld [vmem:[#allocation2 + $0x4c] sm:$0xf]
    %v55 = vld [vmem:[#allocation2 + $0x50] sm:$0xf]
    %v56 = vld [vmem:[#allocation2 + $0x54] sm:$0xf]
    %v57 = vld [vmem:[#allocation2 + $0x58] sm:$0xf]
    %v58 = vld [vmem:[#allocation2 + $0x5c] sm:$0xf]
    %v59 = vld [vmem:[#allocation2 + $0x60] sm:$0xf]
    %v60 = vld [vmem:[#allocation2 + $0x64] sm:$0xf]
    %v61 = vld [vmem:[#allocation2 + $0x68] sm:$0xf]
    %v62 = vld [vmem:[#allocation2 + $0x6c] sm:$0xf]
    %v63 = vld [vmem:[#allocation2 + $0x70] sm:$0xf]
    %v64 = vld [vmem:[#allocation2 + $0x74] sm:$0xf]
    %v65 = vld [vmem:[#allocation2 + $0x78] sm:$0xf]
    %v66 = vld [vmem:[#allocation2 + $0x7c] sm:$0xf]
    %v67 = vld [vmem:[#allocation2 + $0x80] sm:$0xf]
    %v68 = vld [vmem:[#allocation2 + $0x84] sm:$0xf]
    %v69 = vld [vmem:[#allocation2 + $0x88] sm:$0xf]
    %v70 = vld [vmem:[#allocation2 + $0x8c] sm:$0xf]
    %v71 = vld [vmem:[#allocation2 + $0x90] sm:$0xf]
    %v72 = vld [vmem:[#allocation2 + $0x94] sm:$0xf]
    %v73 = vld [vmem:[#allocation2 + $0x98] sm:$0xf]
    %v74 = vld [vmem:[#allocation2 + $0x9c] sm:$0xf]
    %v75 = vld [vmem:[#allocation2 + $0xa0] sm:$0xf]
    %v76 = vld [vmem:[#allocation2 + $0xa4] sm:$0xf]
    %v77 = vld [vmem:[#allocation2 + $0xa8] sm:$0xf]
    %v78 = vld [vmem:[#allocation2 + $0xac] sm:$0xf]
    %v79 = vld [vmem:[#allocation2 + $0xb0] sm:$0xf]
    %v80 = vld [vmem:[#allocation2 + $0xb4] sm:$0xf]
    %v81 = vld [vmem:[#allocation2 + $0xb8] sm:$0xf]
    %v82 = vld [vmem:[#allocation2 + $0xbc] sm:$0xf]
    %v83 = vld [vmem:[#allocation2 + $0xc0] sm:$0xf]
    %v84 = vld [vmem:[#allocation2 + $0xc4] sm:$0xf]
    %v85 = vld [vmem:[#allocation2 + $0xc8] sm:$0xf]
    %v86 = vld [vmem:[#allocation2 + $0xcc] sm:$0xf]
    %v87 = vld [vmem:[#allocation2 + $0xd0] sm:$0xf]
    %v88 = vld [vmem:[#allocation2 + $0xd4] sm:$0xf]
    %v89 = vld [vmem:[#allocation2 + $0xd8] sm:$0xf]
    %v90 = vld [vmem:[#allocation2 + $0xdc] sm:$0xf]
    %v91 = vld [vmem:[#allocation2 + $0xe0] sm:$0xf]
    %v92 = vld [vmem:[#allocation2 + $0xe4] sm:$0xf]
    %v93 = vld [vmem:[#allocation2 + $0xe8] sm:$0xf]
    %v94 = vld [vmem:[#allocation2 + $0xec] sm:$0xf]
    %v95 = vld [vmem:[#allocation2 + $0xf0] sm:$0xf]
    %v96 = vld [vmem:[#allocation2 + $0xf4] sm:$0xf]
    %v97 = vld [vmem:[#allocation2 + $0xf8] sm:$0xf]
    %v98 = vld [vmem:[#allocation2 + $0xfc] sm:$0xf]
    %v99 = vld [vmem:[#allocation2 + $0x100] sm:$0xf]
    %v100 = vld [vmem:[#allocation2 + $0x104] sm:$0xf]
    %v101 = vld [vmem:[#allocation2 + $0x108] sm:$0xf]
    %v102 = vld [vmem:[#allocation2 + $0x10c] sm:$0xf]
    %v103 = vld [vmem:[#allocation2 + $0x110] sm:$0xf]
    %v104 = vld [vmem:[#allocation2 + $0x114] sm:$0xf]
    %v105 = vld [vmem:[#allocation2 + $0x118] sm:$0xf]
    %v106 = vld [vmem:[#allocation2 + $0x11c] sm:$0xf]
    %v107 = vld [vmem:[#allocation2 + $0x120] sm:$0xf]
    %v108 = vld [vmem:[#allocation2 + $0x124] sm:$0xf]
    %v109 = vld [vmem:[#allocation2 + $0x128] sm:$0xf]
    %v110 = vld [vmem:[#allocation2 + $0x12c] sm:$0xf]
    %v111 = vld [vmem:[#allocation2 + $0x130] sm:$0xf]
    %v112 = vld [vmem:[#allocation2 + $0x134] sm:$0xf]
    %v113 = vld [vmem:[#allocation2 + $0x138] sm:$0xf]
    %v114 = vld [vmem:[#allocation2 + $0x13c] sm:$0xf]
    %v115 = vld [vmem:[#allocation2 + $0x140] sm:$0xf]
    %v116 = vld [vmem:[#allocation2 + $0x144] sm:$0xf]
    %v117 = vld [vmem:[#allocation2 + $0x148] sm:$0xf]
    %v118 = vld [vmem:[#allocation2 + $0x14c] sm:$0xf]
    %v119 = vld [vmem:[#allocation2 + $0x150] sm:$0xf]
    %v120 = vld [vmem:[#allocation2 + $0x154] sm:$0xf]
    %v121 = vld [vmem:[#allocation2 + $0x158] sm:$0xf]
    %v122 = vld [vmem:[#allocation2 + $0x15c] sm:$0xf]
    %v123 = vld [vmem:[#allocation2 + $0x160] sm:$0xf]
    %v124 = vld [vmem:[#allocation2 + $0x164] sm:$0xf]
    %v125 = vld [vmem:[#allocation2 + $0x168] sm:$0xf]
    %v126 = vld [vmem:[#allocation2 + $0x16c] sm:$0xf]
    %v127 = vld [vmem:[#allocation2 + $0x170] sm:$0xf]
    %v128 = vld [vmem:[#allocation2 + $0x174] sm:$0xf]
    %v129 = vld [vmem:[#allocation2 + $0x178] sm:$0xf]
    %v130 = vld [vmem:[#allocation2 + $0x17c] sm:$0xf]
    %v131 = vld [vmem:[%s2] sm:$0xf]
    %v132 = vld [vmem:[%s2 + $0x4] sm:$0xf]
    %v133 = vld [vmem:[%s2 + $0x8] sm:$0xf]
    %v134 = vld [vmem:[%s2 + $0xc] sm:$0xf]
    %v135 = vld [vmem:[%s2 + $0x10] sm:$0xf]
    %v136 = vld [vmem:[%s2 + $0x14] sm:$0xf]
    %v137 = vld [vmem:[%s2 + $0x18] sm:$0xf]
    %v138 = vld [vmem:[%s2 + $0x1c] sm:$0xf]
    %v139 = vld [vmem:[%s3] sm:$0x1]
    %v141 = vlaneseq
    %v142 = vshrl.u32 %v141, 7
    %v143 = vsub.s32 0, %v142
    %v144 = vrot.slane %v139, %v143
    %v149 = vunpack.c.l.b16 %v32
    %v150 = vunpack.c.h.b16 %v32
    %v151 = vunpack.c.l.b16 %v33
    %v152 = vunpack.c.h.b16 %v33
    %v153 = vunpack.c.l.b16 %v34
    %v154 = vunpack.c.h.b16 %v34
    %v155 = vpack.c.b16 %v149, %v149
    %v156 = vpack.c.b16 %v150, %v150
    %v157 = vpack.c.b16 %v151, %v151
    %v158 = vpack.c.b16 %v152, %v152
    %v159 = vpack.c.b16 %v153, %v153
    %v160 = vpack.c.b16 %v154, %v154
    %v263 = vunpack.c.l.b16 %v35
    %v264 = vunpack.c.l.b16 %v36
    %v265 = vunpack.c.l.b16 %v37
    %v266 = vunpack.c.l.b16 %v38
    %v267 = vunpack.c.l.b16 %v39
    %v268 = vunpack.c.l.b16 %v40
    %v269 = vunpack.c.l.b16 %v41
    %v270 = vunpack.c.l.b16 %v42
    %v271 = vunpack.c.l.b16 %v43
    %v272 = vunpack.c.l.b16 %v44
    %v273 = vunpack.c.l.b16 %v45
    %v274 = vunpack.c.l.b16 %v46
    %v275 = vunpack.c.l.b16 %v47
    %v276 = vunpack.c.l.b16 %v48
    %v277 = vunpack.c.l.b16 %v49
    %v278 = vunpack.c.l.b16 %v50
    %v279 = vunpack.c.l.b16 %v51
    %v280 = vunpack.c.l.b16 %v52
    %v281 = vunpack.c.l.b16 %v53
    %v282 = vunpack.c.l.b16 %v54
    %v283 = vunpack.c.l.b16 %v55
    %v284 = vunpack.c.l.b16 %v56
    %v285 = vunpack.c.l.b16 %v57
    %v286 = vunpack.c.l.b16 %v58
    %v287 = vunpack.c.l.b16 %v59
    %v288 = vunpack.c.l.b16 %v60
    %v289 = vunpack.c.l.b16 %v61
    %v290 = vunpack.c.l.b16 %v62
    %v291 = vunpack.c.l.b16 %v63
    %v292 = vunpack.c.l.b16 %v64
    %v293 = vunpack.c.l.b16 %v65
    %v294 = vunpack.c.l.b16 %v66
    %v295 = vunpack.c.l.b16 %v67
    %v296 = vunpack.c.l.b16 %v68
    %v297 = vunpack.c.l.b16 %v69
    %v298 = vunpack.c.l.b16 %v70
    %v299 = vunpack.c.l.b16 %v71
    %v300 = vunpack.c.l.b16 %v72
    %v301 = vunpack.c.l.b16 %v73
    %v302 = vunpack.c.l.b16 %v74
    %v303 = vunpack.c.l.b16 %v75
    %v304 = vunpack.c.l.b16 %v76
    %v305 = vunpack.c.l.b16 %v77
    %v306 = vunpack.c.l.b16 %v78
    %v307 = vunpack.c.l.b16 %v79
    %v308 = vunpack.c.l.b16 %v80
    %v309 = vunpack.c.l.b16 %v81
    %v310 = vunpack.c.l.b16 %v82
    %v311 = vunpack.c.l.b16 %v83
    %v312 = vunpack.c.l.b16 %v84
    %v313 = vunpack.c.l.b16 %v85
    %v314 = vunpack.c.l.b16 %v86
    %v315 = vunpack.c.l.b16 %v87
    %v316 = vunpack.c.l.b16 %v88
    %v317 = vunpack.c.l.b16 %v89
    %v318 = vunpack.c.l.b16 %v90
    %v319 = vunpack.c.l.b16 %v91
    %v320 = vunpack.c.l.b16 %v92
    %v321 = vunpack.c.l.b16 %v93
    %v322 = vunpack.c.l.b16 %v94
    %v323 = vunpack.c.l.b16 %v95
    %v324 = vunpack.c.l.b16 %v96
    %v325 = vunpack.c.l.b16 %v97
    %v326 = vunpack.c.l.b16 %v98
    %v327 = vunpack.c.l.b16 %v99
    %v328 = vunpack.c.l.b16 %v100
    %v329 = vunpack.c.l.b16 %v101
    %v330 = vunpack.c.l.b16 %v102
    %v331 = vunpack.c.l.b16 %v103
    %v332 = vunpack.c.l.b16 %v104
    %v333 = vunpack.c.l.b16 %v105
    %v334 = vunpack.c.l.b16 %v106
    %v335 = vunpack.c.l.b16 %v107
    %v336 = vunpack.c.l.b16 %v108
    %v337 = vunpack.c.l.b16 %v109
    %v338 = vunpack.c.l.b16 %v110
    %v339 = vunpack.c.l.b16 %v111
    %v340 = vunpack.c.l.b16 %v112
    %v341 = vunpack.c.l.b16 %v113
    %v342 = vunpack.c.l.b16 %v114
    %v343 = vunpack.c.l.b16 %v115
    %v344 = vunpack.c.l.b16 %v116
    %v345 = vunpack.c.l.b16 %v117
    %v346 = vunpack.c.l.b16 %v118
    %v347 = vunpack.c.l.b16 %v119
    %v348 = vunpack.c.l.b16 %v120
    %v349 = vunpack.c.l.b16 %v121
    %v350 = vunpack.c.l.b16 %v122
    %v351 = vunpack.c.l.b16 %v123
    %v352 = vunpack.c.l.b16 %v124
    %v353 = vunpack.c.l.b16 %v125
    %v354 = vunpack.c.l.b16 %v126
    %v355 = vunpack.c.l.b16 %v127
    %v356 = vunpack.c.l.b16 %v128
    %v357 = vunpack.c.l.b16 %v129
    %v358 = vunpack.c.l.b16 %v130
    %v359 = vpack.c.b16 %v264, %v263
    %v360 = vpack.c.b16 %v266, %v265
    %v361 = vpack.c.b16 %v268, %v267
    %v362 = vpack.c.b16 %v270, %v269
    %v363 = vpack.c.b16 %v272, %v271
    %v364 = vpack.c.b16 %v274, %v273
    %v365 = vpack.c.b16 %v276, %v275
    %v366 = vpack.c.b16 %v278, %v277
    %v367 = vpack.c.b16 %v280, %v279
    %v368 = vpack.c.b16 %v282, %v281
    %v369 = vpack.c.b16 %v284, %v283
    %v370 = vpack.c.b16 %v286, %v285
    %v371 = vpack.c.b16 %v288, %v287
    %v372 = vpack.c.b16 %v290, %v289
    %v373 = vpack.c.b16 %v292, %v291
    %v374 = vpack.c.b16 %v294, %v293
    %v375 = vpack.c.b16 %v296, %v295
    %v376 = vpack.c.b16 %v298, %v297
    %v377 = vpack.c.b16 %v300, %v299
    %v378 = vpack.c.b16 %v302, %v301
    %v379 = vpack.c.b16 %v304, %v303
    %v380 = vpack.c.b16 %v306, %v305
    %v381 = vpack.c.b16 %v308, %v307
    %v382 = vpack.c.b16 %v310, %v309
    %v383 = vpack.c.b16 %v312, %v311
    %v384 = vpack.c.b16 %v314, %v313
    %v385 = vpack.c.b16 %v316, %v315
    %v386 = vpack.c.b16 %v318, %v317
    %v387 = vpack.c.b16 %v320, %v319
    %v388 = vpack.c.b16 %v322, %v321
    %v389 = vpack.c.b16 %v324, %v323
    %v390 = vpack.c.b16 %v326, %v325
    %v391 = vpack.c.b16 %v328, %v327
    %v392 = vpack.c.b16 %v330, %v329
    %v393 = vpack.c.b16 %v332, %v331
    %v394 = vpack.c.b16 %v334, %v333
    %v395 = vpack.c.b16 %v336, %v335
    %v396 = vpack.c.b16 %v338, %v337
    %v397 = vpack.c.b16 %v340, %v339
    %v398 = vpack.c.b16 %v342, %v341
    %v399 = vpack.c.b16 %v344, %v343
    %v400 = vpack.c.b16 %v346, %v345
    %v401 = vpack.c.b16 %v348, %v347
    %v402 = vpack.c.b16 %v350, %v349
    %v403 = vpack.c.b16 %v352, %v351
    %v404 = vpack.c.b16 %v354, %v353
    %v405 = vpack.c.b16 %v356, %v355
    %v406 = vpack.c.b16 %v358, %v357
    %455 = vmatprep.subr.bf16.mxu0 0
    %456 = vmatpush1.bf16.msra.mxu0 %v366
    %457 = vmatprep.subr.bf16.mxu0 0
    %458 = vmatpush1.bf16.msra.mxu0 %v365
    %459 = vmatprep.subr.bf16.mxu0 0
    %460 = vmatpush1.bf16.msra.mxu0 %v364
    %461 = vmatprep.subr.bf16.mxu0 0
    %462 = vmatpush1.bf16.msra.mxu0 %v363
    %463 = vmatprep.subr.bf16.mxu0 0
    %464 = vmatpush1.bf16.msra.mxu0 %v362
    %465 = vmatprep.subr.bf16.mxu0 0
    %466 = vmatpush1.bf16.msra.mxu0 %v361
    %467 = vmatprep.subr.bf16.mxu0 0
    %468 = vmatpush1.bf16.msra.mxu0 %v360
    %469 = vmatprep.subr.bf16.mxu0 0
    %470 = vmatpush1.bf16.msra.mxu0 %v359
    %471 = vmatprep.subr.bf16.mxu0 0
    %472 = vmatpush2.bf16.msra.mxu0 %v374
    %473 = vmatprep.subr.bf16.mxu0 0
    %474 = vmatpush2.bf16.msra.mxu0 %v373
    %475 = vmatprep.subr.bf16.mxu0 0
    %476 = vmatpush2.bf16.msra.mxu0 %v372
    %477 = vmatprep.subr.bf16.mxu0 0
    %478 = vmatpush2.bf16.msra.mxu0 %v371
    %479 = vmatprep.subr.bf16.mxu0 0
    %480 = vmatpush2.bf16.msra.mxu0 %v370
    %481 = vmatprep.subr.bf16.mxu0 0
    %482 = vmatpush2.bf16.msra.mxu0 %v369
    %483 = vmatprep.subr.bf16.mxu0 0
    %484 = vmatpush2.bf16.msra.mxu0 %v368
    %485 = vmatprep.subr.bf16.mxu0 0
    %486 = vmatpush2.bf16.msra.mxu0 %v367
    %487 = vmatprep.mubr.bf16.mxu0 %v156
    %488 = vmatmul.mubr.bf16.gmra.mxu0 %v155
    %v489 = vpop.f32.mrf.mxu0
    %v490 = vadd.f32 %v144, %v489
    %v491 = vpop.f32.mrf.mxu0
    %v492 = vpop.f32.mrf.mxu0
    %v493 = vpop.f32.mrf.mxu0
    %494 = vdwg.mxu0
    %495 = vmatprep.subr.bf16.mxu0 0
    %496 = vmatpush1.bf16.msra.mxu0 %v382
    %497 = vmatprep.subr.bf16.mxu0 0
    %498 = vmatpush1.bf16.msra.mxu0 %v381
    %499 = vmatprep.subr.bf16.mxu0 0
    %500 = vmatpush1.bf16.msra.mxu0 %v380
    %501 = vmatprep.subr.bf16.mxu0 0
    %502 = vmatpush1.bf16.msra.mxu0 %v379
    %503 = vmatprep.subr.bf16.mxu0 0
    %504 = vmatpush1.bf16.msra.mxu0 %v378
    %505 = vmatprep.subr.bf16.mxu0 0
    %506 = vmatpush1.bf16.msra.mxu0 %v377
    %507 = vmatprep.subr.bf16.mxu0 0
    %508 = vmatpush1.bf16.msra.mxu0 %v376
    %509 = vmatprep.subr.bf16.mxu0 0
    %510 = vmatpush1.bf16.msra.mxu0 %v375
    %511 = vmatprep.subr.bf16.mxu0 0
    %512 = vmatpush2.bf16.msra.mxu0 %v390
    %513 = vmatprep.subr.bf16.mxu0 0
    %514 = vmatpush2.bf16.msra.mxu0 %v389
    %515 = vmatprep.subr.bf16.mxu0 0
    %516 = vmatpush2.bf16.msra.mxu0 %v388
    %517 = vmatprep.subr.bf16.mxu0 0
    %518 = vmatpush2.bf16.msra.mxu0 %v387
    %519 = vmatprep.subr.bf16.mxu0 0
    %520 = vmatpush2.bf16.msra.mxu0 %v386
    %521 = vmatprep.subr.bf16.mxu0 0
    %522 = vmatpush2.bf16.msra.mxu0 %v385
    %523 = vmatprep.subr.bf16.mxu0 0
    %524 = vmatpush2.bf16.msra.mxu0 %v384
    %525 = vmatprep.subr.bf16.mxu0 0
    %526 = vmatpush2.bf16.msra.mxu0 %v383
    %527 = vmatprep.mubr.bf16.mxu0 %v158
    %528 = vmatmul.mubr.bf16.gmra.mxu0 %v157
    %v529 = vpop.f32.mrf.mxu0
    %v530 = vadd.f32 %v490, %v529
    %v531 = vpop.f32.mrf.mxu0
    %v532 = vpop.f32.mrf.mxu0
    %v533 = vpop.f32.mrf.mxu0
    %534 = vdwg.mxu0
    %535 = vmatprep.subr.bf16.mxu0 0
    %536 = vmatpush1.bf16.msra.mxu0 %v398
    %537 = vmatprep.subr.bf16.mxu0 0
    %538 = vmatpush1.bf16.msra.mxu0 %v397
    %539 = vmatprep.subr.bf16.mxu0 0
    %540 = vmatpush1.bf16.msra.mxu0 %v396
    %541 = vmatprep.subr.bf16.mxu0 0
    %542 = vmatpush1.bf16.msra.mxu0 %v395
    %543 = vmatprep.subr.bf16.mxu0 0
    %544 = vmatpush1.bf16.msra.mxu0 %v394
    %545 = vmatprep.subr.bf16.mxu0 0
    %546 = vmatpush1.bf16.msra.mxu0 %v393
    %547 = vmatprep.subr.bf16.mxu0 0
    %548 = vmatpush1.bf16.msra.mxu0 %v392
    %549 = vmatprep.subr.bf16.mxu0 0
    %550 = vmatpush1.bf16.msra.mxu0 %v391
    %551 = vmatprep.subr.bf16.mxu0 0
    %552 = vmatpush2.bf16.msra.mxu0 %v406
    %553 = vmatprep.subr.bf16.mxu0 0
    %554 = vmatpush2.bf16.msra.mxu0 %v405
    %555 = vmatprep.subr.bf16.mxu0 0
    %556 = vmatpush2.bf16.msra.mxu0 %v404
    %557 = vmatprep.subr.bf16.mxu0 0
    %558 = vmatpush2.bf16.msra.mxu0 %v403
    %559 = vmatprep.subr.bf16.mxu0 0
    %560 = vmatpush2.bf16.msra.mxu0 %v402
    %561 = vmatprep.subr.bf16.mxu0 0
    %562 = vmatpush2.bf16.msra.mxu0 %v401
    %563 = vmatprep.subr.bf16.mxu0 0
    %564 = vmatpush2.bf16.msra.mxu0 %v400
    %565 = vmatprep.subr.bf16.mxu0 0
    %566 = vmatpush2.bf16.msra.mxu0 %v399
    %567 = vmatprep.mubr.bf16.mxu0 %v160
    %568 = vmatmul.mubr.bf16.gmra.mxu0 %v159
    %v569 = vpop.f32.mrf.mxu0
    %v570 = vadd.f32 %v530, %v569
    %v571 = vpop.f32.mrf.mxu0
    %v572 = vpop.f32.mrf.mxu0
    %v573 = vpop.f32.mrf.mxu0
    %574 = vdwg.mxu0
    %v575 = vmax.f32 %v570, 0.0
    %v576 = vpack.c.bf16 %v575, %v575
    %v585 = vunpack.c.l.b16 %v131
    %v586 = vunpack.c.l.b16 %v132
    %v587 = vunpack.c.l.b16 %v133
    %v588 = vunpack.c.l.b16 %v134
    %v589 = vunpack.c.l.b16 %v135
    %v590 = vunpack.c.l.b16 %v136
    %v591 = vunpack.c.l.b16 %v137
    %v592 = vunpack.c.l.b16 %v138
    %v593 = vpack.c.b16 %v586, %v585
    %v594 = vpack.c.b16 %v588, %v587
    %v595 = vpack.c.b16 %v590, %v589
    %v596 = vpack.c.b16 %v592, %v591
    %601 = vrot.lane.b32.xlu0 %v144, 64
    %v602 = vpop.permute.xlu0 %601
    %vm604 = vcmask 523264
    %v606 = vsel %vm604, %v576, 0
    %608 = vmatprep.subr.bf16.mxu0 0
    %609 = vmatpush1.bf16.msra.mxu0 0
    %610 = vmatprep.subr.bf16.mxu0 0
    %611 = vmatpush1.bf16.msra.mxu0 0
    %612 = vmatprep.subr.bf16.mxu0 0
    %613 = vmatpush1.bf16.msra.mxu0 0
    %614 = vmatprep.subr.bf16.mxu0 0
    %615 = vmatpush1.bf16.msra.mxu0 0
    %616 = vmatprep.subr.bf16.mxu0 0
    %617 = vmatpush1.bf16.msra.mxu0 %v596
    %618 = vmatprep.subr.bf16.mxu0 0
    %619 = vmatpush1.bf16.msra.mxu0 %v595
    %620 = vmatprep.subr.bf16.mxu0 0
    %621 = vmatpush1.bf16.msra.mxu0 %v594
    %622 = vmatprep.subr.bf16.mxu0 0
    %623 = vmatpush1.bf16.msra.mxu0 %v593
    %624 = vmatprep.subr.bf16.mxu0 0
    %625 = vmatpush2.bf16.msra.mxu0 0
    %626 = vmatprep.subr.bf16.mxu0 0
    %627 = vmatpush2.bf16.msra.mxu0 0
    %628 = vmatprep.subr.bf16.mxu0 0
    %629 = vmatpush2.bf16.msra.mxu0 0
    %630 = vmatprep.subr.bf16.mxu0 0
    %631 = vmatpush2.bf16.msra.mxu0 0
    %632 = vmatprep.subr.bf16.mxu0 0
    %633 = vmatpush2.bf16.msra.mxu0 0
    %634 = vmatprep.subr.bf16.mxu0 0
    %635 = vmatpush2.bf16.msra.mxu0 0
    %636 = vmatprep.subr.bf16.mxu0 0
    %637 = vmatpush2.bf16.msra.mxu0 0
    %638 = vmatprep.subr.bf16.mxu0 0
    %639 = vmatpush2.bf16.msra.mxu0 0
    %640 = vmatprep.mubr.bf16.mxu0 0
    %641 = vmatmul.mubr.bf16.gmra.mxu0 %v606
    %v642 = vpop.f32.mrf.mxu0
    %v643 = vadd.f32 %v602, %v642
    %v644 = vpop.f32.mrf.mxu0
    %v645 = vpop.f32.mrf.mxu0
    %v646 = vpop.f32.mrf.mxu0
    %647 = vdwg.mxu0
    %v648 = vrcp.pop 0.01
    %v649 = vmul.f32 %v643, %v648
    %v651 = vrot.slane %v649, 4
    %v653 = vmax.f32 %v649, %v651
    %v654 = vsub.f32 %v649, %v651
    %v655 = vand.u32 2147483647, %v654
    %v656 = vsub.f32 0.0, %v655
    %v657 = vmax.f32 %v656, 0.0
    %v658 = vand.u32 2147483647, %v656
    %v659 = vsub.f32 0.0, %v658
    %v660 = vmul.f32 %v659, 1.442695
    %v661 = vpow.pop %v660
    %v662 = vadd.f32 %v661, 1.0
    %v663 = vlog2.pop %v662
    %v664 = vmul.f32 %v663, 0.6931472
    %v665 = vadd.f32 %v657, %v664
    %v666 = vadd.f32 %v653, %v665
    %v667 = vmul.f32 %v666, 0.01
    %v669 = vrot.slane %v643, 4
    %v671 = vmax.f32 %v643, %v669
    %v672 = vmax.f32 %v667, %v671
    %v673 = vsub.f32 0.0, %v643
    %v674 = vmul.f32 %v673, %v648
    %v676 = vrot.slane %v674, 4
    %v678 = vmax.f32 %v674, %v676
    %v679 = vsub.f32 %v674, %v676
    %v680 = vand.u32 2147483647, %v679
    %v681 = vsub.f32 0.0, %v680
    %v682 = vmax.f32 %v681, 0.0
    %v683 = vand.u32 2147483647, %v681
    %v684 = vsub.f32 0.0, %v683
    %v685 = vmul.f32 %v684, 1.442695
    %v686 = vpow.pop %v685
    %v687 = vadd.f32 %v686, 1.0
    %v688 = vlog2.pop %v687
    %v689 = vmul.f32 %v688, 0.6931472
    %v690 = vadd.f32 %v682, %v689
    %v691 = vadd.f32 %v678, %v690
    %v692 = vmul.f32 %v691, -0.01
    %v693 = vmin.f32 %v643, %v669
    %v694 = vmin.f32 %v692, %v693
    %696 = vrot.lane.b32.xlu0 %v672, 16
    %v697 = vpop.permute.xlu0 %696
    %v699 = vsub.f32 %v694, %v697
    %v700 = vsub.f32 %v699, 0.011544313
    %v701 = vmax.f32 %v700, 0.0
    %v702 = vand.u32 2147483647, %v700
    %v703 = vsub.f32 0.0, %v702
    %v704 = vmul.f32 %v703, 1.442695
    %v705 = vpow.pop %v704
    %v706 = vadd.f32 %v705, 1.0
    %v707 = vlog2.pop %v706
    %v708 = vmul.f32 %v707, 0.6931472
    %v709 = vadd.f32 %v701, %v708
    %v710 = vmax.f32 %v709, 1.1754944e-38
    %v711 = vlog2.pop %v710
    %v712 = vmul.f32 %v711, 0.6931472
    %714 = vrot.lane.b32.xlu0 %v712, 112
    %v715 = vpop.permute.xlu0 %714
    %vm717 = vcmask 130052
    %v718 = vsel %vm717, %v715, 0.0
    %719 = vadd.xlane.f32.xlu0 %v718
    %v720 = vpop.xlane.xlu0 %719
    %721 = vrot.lane.b32.xlu0 %v643, 16
    %v722 = vpop.permute.xlu0 %721
    %v724 = vsub.f32 %v643, %v722
    %v725 = vsub.f32 %v724, 0.011544313
    %v726 = vmax.f32 %v725, 0.0
    %v727 = vand.u32 2147483647, %v725
    %v728 = vsub.f32 0.0, %v727
    %v729 = vmul.f32 %v728, 1.442695
    %v730 = vpow.pop %v729
    %v731 = vadd.f32 %v730, 1.0
    %v732 = vlog2.pop %v731
    %v733 = vmul.f32 %v732, 0.6931472
    %v734 = vadd.f32 %v726, %v733
    %v735 = vmax.f32 %v734, 1.1754944e-38
    %v736 = vlog2.pop %v735
    %v737 = vmul.f32 %v736, 0.6931472
    %739 = vrot.lane.b32.xlu0 %v737, 112
    %v740 = vpop.permute.xlu0 %739
    %vm742 = vcmask 128004
    %v743 = vsel %vm742, %v740, 0.0
    %744 = vadd.xlane.f32.xlu0 %v743
    %v745 = vpop.xlane.xlu0 %744
    %v746 = vsub.f32 %v720, 1.0
    %v748 = vrot.slane %v720, 2
    %v750 = vsub.f32 %v746, %v748
    %v751 = vsub.f32 0.0, %v750
    %v752 = vmax.f32 %v751, 0.0
    %v753 = vand.u32 2147483647, %v751
    %v754 = vsub.f32 0.0, %v753
    %v755 = vmul.f32 %v754, 1.442695
    %v756 = vpow.pop %v755
    %v757 = vadd.f32 %v756, 1.0
    %v758 = vlog2.pop %v757
    %v759 = vmul.f32 %v758, 0.6931472
    %v760 = vadd.f32 %v752, %v759
    %v762 = vrot.slane %v760, 4
    %vm764 = vcmask 1024
    %v765 = vsel %vm764, %v762, 0.0
    %766 = vadd.xlane.f32.xlu0 %v765
    %v767 = vpop.xlane.xlu0 %766
    %v768 = vrot.slane %v767, 4
    %v769 = vadd.f32 %v767, %v768
    %v770 = vrot.slane %v769, 2
    %v771 = vadd.f32 %v769, %v770
    %v772 = vrot.slane %v771, 1
    %v773 = vadd.f32 %v771, %v772
    %s774 = vtos %v773
    %v775 = vstv %s774
    %v776 = vrcp.pop 2.0
    %v777 = vmul.f32 %v775, %v776
    %v778 = vrcp.pop %v745
    %v779 = vmul.f32 %v720, %v778
    %v780 = vsub.f32 %v779, 1.0
    %v781 = vmul.f32 %v780, %v780
    %v783 = vrot.slane %v781, 4
    %v785 = vsel %vm764, %v783, 0.0
    %786 = vadd.xlane.f32.xlu0 %v785
    %v787 = vpop.xlane.xlu0 %786
    %v788 = vrot.slane %v787, 4
    %v789 = vadd.f32 %v787, %v788
    %v790 = vrot.slane %v789, 2
    %v791 = vadd.f32 %v789, %v790
    %v792 = vrot.slane %v791, 1
    %v793 = vadd.f32 %v791, %v792
    %s794 = vtos %v793
    %v795 = vstv %s794
    %v796 = vmul.f32 %v795, %v776
    %v798 = vrot.slane %v745, 6
    %v800 = vrcp.pop %v798
    %v801 = vmul.f32 %v720, %v800
    %v802 = vmul.f32 %v801, %v801
    %v804 = vrot.slane %v802, 6
    %v806 = vsel %vm764, %v804, 0.0
    %807 = vadd.xlane.f32.xlu0 %v806
    %v808 = vpop.xlane.xlu0 %807
    %v809 = vrot.slane %v808, 4
    %v810 = vadd.f32 %v808, %v809
    %v811 = vrot.slane %v810, 2
    %v812 = vadd.f32 %v810, %v811
    %v813 = vrot.slane %v812, 1
    %v814 = vadd.f32 %v812, %v813
    %s815 = vtos %v814
    %v816 = vstv %s815
    %v817 = vmul.f32 %v816, %v776
    %v818 = vadd.f32 %v796, %v817
    %v819 = vmul.f32 %v818, 0.1
    %v820 = vadd.f32 %v777, %v819
    %v821 = vlaneseq
    %v822 = vand.u32 %v821, 127
    %vm823 = vcmp.eq.s32.totalorder %v822, 0
    %vm824 = vcmp.eq.s32.totalorder %v822, 1
    %vm825 = vcmp.eq.s32.totalorder %v822, 2
    %v826 = vsel %vm825, %v818, 0.0
    %v827 = vsel %vm824, %v777, %v826
    %v828 = vsel %vm823, %v820, %v827
    %829 = vst [vmem:[%s4] sm:$0x1] %v828
    // Predicated region
    $region22: #{fuzzy_box_forward.1} parent=1 // pred_check
      _
    $region23: #{fuzzy_box_forward.1} parent=1 // pred_check_branch
      %831 = sbr.rel (0) target = $region25
    $region24: #{fuzzy_box_forward.1} parent=1 // pred_region
      _
    $region25: #{fuzzy_box_forward.1} parent=1 // pred_fallthru
      _
    // Predicated region
    $region26: #{fuzzy_box_forward.1} parent=1 // pred_check
      _
    $region27: #{fuzzy_box_forward.1} parent=1 // pred_check_branch
      %833 = sbr.rel (0) target = $region29
    $region28: #{fuzzy_box_forward.1} parent=1 // pred_region
      _
    $region29: #{fuzzy_box_forward.1} parent=1 // pred_fallthru
      _
    %834 = vsyncpa [#allocation3], 1

</llo_original>
